<compile_context>
chip_gen: v6e
topology: v6e:2x2x1
jax: 0.10.0
libtpu: 0.0.40
codegen_flags: <defaults>
</compile_context>

<pallas_src>
import jax
import jax.numpy as jnp
from jax.experimental import pallas as pl
from jax.experimental.pallas import tpu as pltpu


def _round_up(n, m):
    return ((n + m - 1) // m) * m


def simplenet_kernel(x_ref, w1_ref, t1_ref, w2_ref, t2_ref, w3_ref, b3_ref,
                     o_ref):
    # x_ref: [F, TB] bf16 (batch on lanes).
    # Pre-transposed, scale-folded weights: w1 [H1, F], w2 [H2, H1], w3 [C, H2]
    # in bf16; shifts t1 [H1, 1], t2 [H2, 1], b3 [C, 1] in f32.
    x = x_ref[...]

    # Block 1: Linear (BN scale folded into weights) + shift + ReLU
    h1 = jnp.dot(w1_ref[...], x, preferred_element_type=jnp.float32)
    h1 = jnp.maximum(h1 + t1_ref[...], 0.0)

    # Block 2
    h2 = jnp.dot(w2_ref[...], h1.astype(w2_ref.dtype),
                 preferred_element_type=jnp.float32)
    h2 = jnp.maximum(h2 + t2_ref[...], 0.0)

    # Head: Linear(32 -> 3)
    logits = jnp.dot(w3_ref[...], h2.astype(w3_ref.dtype),
                     preferred_element_type=jnp.float32) + b3_ref[...]

    # Softmax over classes (sublane axis 0); per-column -> padded batch columns
    # never contaminate valid ones.
    m = jnp.max(logits, axis=0, keepdims=True)
    e = jnp.exp(logits - m)
    denom = jnp.sum(e, axis=0, keepdims=True)
    o_ref[...] = (e * pl.reciprocal(denom, approx=True)).astype(o_ref.dtype)


def simplenet_forward(x, kernel_params, *, batch_tile=8192):
    """x: [B, F] f32.  Returns softmax probabilities [B, C] f32."""
    w1t, t1, w2t, t2, w3t, b3 = kernel_params
    B, F = x.shape
    C = w3t.shape[0]

    # Batch tile: multiple of 128 lanes; pad B up to a multiple of the tile.
    tb = min(batch_tile, _round_up(B, 128))
    bp = _round_up(B, tb)

    xt = x.astype(jnp.bfloat16).T                    # [F, B], batch on lanes
    if bp != B:
        xt = jnp.pad(xt, ((0, 0), (0, bp - B)))      # zero-pad extra columns

    const = lambda i: (0, 0)                         # resident across steps
    out = pl.pallas_call(
        simplenet_kernel,
        out_shape=jax.ShapeDtypeStruct((C, bp), jnp.float32),
        grid=(bp // tb,),
        in_specs=[
            pl.BlockSpec((F, tb), lambda i: (0, i)),   # x tile (pipelined)
            pl.BlockSpec(w1t.shape, const),
            pl.BlockSpec(t1.shape, const),
            pl.BlockSpec(w2t.shape, const),
            pl.BlockSpec(t2.shape, const),
            pl.BlockSpec(w3t.shape, const),
            pl.BlockSpec(b3.shape, const),
        ],
        out_specs=pl.BlockSpec((C, tb), lambda i: (0, i)),
        compiler_params=pltpu.CompilerParams(
            dimension_semantics=("parallel",),
            vmem_limit_bytes=48 * 1024 * 1024),
    )(xt, w1t, t1, w2t, t2, w3t, b3)

    return out[:, :B].T                               # back to [B, C]


def make_params(key, n_features=4, n_classes=3, hidden_1=64, hidden_2=32,
                eps=1e-5):
    """f32 parameters matching the PyTorch module, with inference-mode BN
    folded into the linear weights (scale) and an additive shift.

    Linear weights/biases ~ U(-1/sqrt(fan_in), 1/sqrt(fan_in)) (PyTorch default).
    BatchNorm1d of a fresh module: gamma=1, beta=0, running_mean=0, running_var=1.
    """
    ks = jax.random.split(key, 6)

    def linear(kw, kb, fan_in, fan_out):
        bound = 1.0 / jnp.sqrt(fan_in)
        w = jax.random.uniform(kw, (fan_in, fan_out), jnp.float32, -bound, bound)
        b = jax.random.uniform(kb, (fan_out,), jnp.float32, -bound, bound)
        return w, b

    w1, b1 = linear(ks[0], ks[1], n_features, hidden_1)
    w2, b2 = linear(ks[2], ks[3], hidden_1, hidden_2)
    w3, b3 = linear(ks[4], ks[5], hidden_2, n_classes)

    def fold_bn(w, b, n, gamma=None, beta=None, mean=None, var=None):
        gamma = jnp.ones((n,), jnp.float32) if gamma is None else gamma
        beta = jnp.zeros((n,), jnp.float32) if beta is None else beta
        mean = jnp.zeros((n,), jnp.float32) if mean is None else mean
        var = jnp.ones((n,), jnp.float32) if var is None else var
        scale = gamma / jnp.sqrt(var + eps)
        w_folded = w * scale[None, :]                 # scale into weight cols
        shift = scale * (b - mean) + beta
        return w_folded, shift

    w1f, t1 = fold_bn(w1, b1, hidden_1)
    w2f, t2 = fold_bn(w2, b2, hidden_2)
    return (w1f, t1, w2f, t2, w3, b3)


def prepare_kernel_params(params):
    """Transpose to feature-major, cast weights to bf16, shifts stay f32."""
    w1f, t1, w2f, t2, w3, b3 = params
    bf = jnp.bfloat16
    return (w1f.T.astype(bf), t1.reshape(-1, 1),
            w2f.T.astype(bf), t2.reshape(-1, 1),
            w3.T.astype(bf), b3.reshape(-1, 1))


def reference_forward(x, params):
    w1f, t1, w2f, t2, w3, b3 = params
    h1 = jnp.maximum(x @ w1f + t1, 0.0)
    h2 = jnp.maximum(h1 @ w2f + t2, 0.0)
    logits = h2 @ w3 + b3
    return jax.nn.softmax(logits, axis=1)


if __name__ == "__main__":
    key = jax.random.PRNGKey(0)
    k_x, k_p = jax.random.split(key)

    B, n_features = 8, 4
    x = jax.random.normal(k_x, (B, n_features), jnp.float32)

    params = make_params(k_p)                 # f32, for the reference
    kparams = prepare_kernel_params(params)   # bf16, transposed, for the kernel

    out = simplenet_forward(x, kparams)
    out = jax.block_until_ready(out)

    ref = reference_forward(x, params)
    assert out.shape == (B, 3)
    # bf16 matmul operands + approx reciprocal -> loosen tolerances vs f32 ref.
    assert jnp.allclose(jnp.sum(out, axis=1), 1.0, atol=5e-3)
    assert jnp.allclose(out, ref, atol=2e-2, rtol=2e-2)

    print("KERNEL_OK")
</pallas_src>

<mosaic_0001>
module attributes {stable_mosaic.version = 11 : i64} {
  func.func @simplenet_kernel(%arg0: i32, %arg1: memref<4x128xbf16, #tpu.memory_space<vmem>>, %arg2: memref<64x4xbf16, #tpu.memory_space<vmem>>, %arg3: memref<64x1xf32, #tpu.memory_space<vmem>>, %arg4: memref<32x64xbf16, #tpu.memory_space<vmem>>, %arg5: memref<32x1xf32, #tpu.memory_space<vmem>>, %arg6: memref<3x32xbf16, #tpu.memory_space<vmem>>, %arg7: memref<3x1xf32, #tpu.memory_space<vmem>>, %arg8: memref<3x128xf32, #tpu.memory_space<vmem>>) attributes {dimension_semantics = [#tpu.dimension_semantics<parallel>], iteration_bounds = array<i64: 1>, scalar_prefetch = 0 : i64, scratch_operands = 0 : i64, tpu.core_type = #tpu.core_type<tc>, window_params = [{transform_indices = @transform_0, window_bounds = array<i64: 4, 128>}, {pipeline_mode = #tpu.pipeline_mode<synchronous>, transform_indices = @transform_1, window_bounds = array<i64: 64, 4>}, {pipeline_mode = #tpu.pipeline_mode<synchronous>, transform_indices = @transform_2, window_bounds = array<i64: 64, 1>}, {pipeline_mode = #tpu.pipeline_mode<synchronous>, transform_indices = @transform_3, window_bounds = array<i64: 32, 64>}, {pipeline_mode = #tpu.pipeline_mode<synchronous>, transform_indices = @transform_4, window_bounds = array<i64: 32, 1>}, {pipeline_mode = #tpu.pipeline_mode<synchronous>, transform_indices = @transform_5, window_bounds = array<i64: 3, 32>}, {pipeline_mode = #tpu.pipeline_mode<synchronous>, transform_indices = @transform_6, window_bounds = array<i64: 3, 1>}, {transform_indices = @transform_7, window_bounds = array<i64: 3, 128>}]} {
    %c0 = arith.constant 0 : index
    %c0_0 = arith.constant 0 : index
    %0 = vector.load %arg1[%c0, %c0_0] : memref<4x128xbf16, #tpu.memory_space<vmem>>, vector<4x128xbf16>
    %c0_1 = arith.constant 0 : index
    %c0_2 = arith.constant 0 : index
    %1 = vector.load %arg2[%c0_1, %c0_2] : memref<64x4xbf16, #tpu.memory_space<vmem>>, vector<64x4xbf16>
    %cst = arith.constant dense<0.000000e+00> : vector<64x128xf32>
    %2 = tpu.matmul %1, %0, %cst {dimension_numbers = #tpu.dot_dimension_numbers<[1], [0], [0], [1], [0, 0, 1, 1], [], []>} : vector<64x4xbf16>, vector<4x128xbf16>, vector<64x128xf32> -> vector<64x128xf32>
    %c0_3 = arith.constant 0 : index
    %c0_4 = arith.constant 0 : index
    %3 = vector.load %arg3[%c0_3, %c0_4] : memref<64x1xf32, #tpu.memory_space<vmem>>, vector<64x1xf32>
    %4 = vector.broadcast %3 : vector<64x1xf32> to vector<64x128xf32>
    %5 = arith.addf %2, %4 : vector<64x128xf32>
    %cst_5 = arith.constant 0.000000e+00 : f32
    %6 = vector.broadcast %cst_5 : f32 to vector<64x128xf32>
    %7 = arith.maximumf %5, %6 : vector<64x128xf32>
    %c0_6 = arith.constant 0 : index
    %c0_7 = arith.constant 0 : index
    %8 = vector.load %arg4[%c0_6, %c0_7] : memref<32x64xbf16, #tpu.memory_space<vmem>>, vector<32x64xbf16>
    %9 = arith.truncf %7 : vector<64x128xf32> to vector<64x128xbf16>
    %cst_8 = arith.constant dense<0.000000e+00> : vector<32x128xf32>
    %10 = tpu.matmul %8, %9, %cst_8 {dimension_numbers = #tpu.dot_dimension_numbers<[1], [0], [0], [1], [0, 0, 1, 1], [], []>} : vector<32x64xbf16>, vector<64x128xbf16>, vector<32x128xf32> -> vector<32x128xf32>
    %c0_9 = arith.constant 0 : index
    %c0_10 = arith.constant 0 : index
    %11 = vector.load %arg5[%c0_9, %c0_10] : memref<32x1xf32, #tpu.memory_space<vmem>>, vector<32x1xf32>
    %12 = vector.broadcast %11 : vector<32x1xf32> to vector<32x128xf32>
    %13 = arith.addf %10, %12 : vector<32x128xf32>
    %cst_11 = arith.constant 0.000000e+00 : f32
    %14 = vector.broadcast %cst_11 : f32 to vector<32x128xf32>
    %15 = arith.maximumf %13, %14 : vector<32x128xf32>
    %c0_12 = arith.constant 0 : index
    %c0_13 = arith.constant 0 : index
    %16 = vector.load %arg6[%c0_12, %c0_13] : memref<3x32xbf16, #tpu.memory_space<vmem>>, vector<3x32xbf16>
    %17 = arith.truncf %15 : vector<32x128xf32> to vector<32x128xbf16>
    %cst_14 = arith.constant dense<0.000000e+00> : vector<3x128xf32>
    %18 = tpu.matmul %16, %17, %cst_14 {dimension_numbers = #tpu.dot_dimension_numbers<[1], [0], [0], [1], [0, 0, 1, 1], [], []>} : vector<3x32xbf16>, vector<32x128xbf16>, vector<3x128xf32> -> vector<3x128xf32>
    %c0_15 = arith.constant 0 : index
    %c0_16 = arith.constant 0 : index
    %19 = vector.load %arg7[%c0_15, %c0_16] : memref<3x1xf32, #tpu.memory_space<vmem>>, vector<3x1xf32>
    %20 = vector.broadcast %19 : vector<3x1xf32> to vector<3x128xf32>
    %21 = arith.addf %18, %20 : vector<3x128xf32>
    %cst_17 = arith.constant dense<0xFF800000> : vector<128xf32>
    %22 = vector.multi_reduction <maximumf>, %21, %cst_17 [0] : vector<3x128xf32> to vector<128xf32>
    %23 = vector.shape_cast %22 : vector<128xf32> to vector<1x128xf32>
    %24 = vector.broadcast %23 : vector<1x128xf32> to vector<3x128xf32>
    %25 = arith.subf %21, %24 : vector<3x128xf32>
    %26 = math.exp %25 : vector<3x128xf32>
    %cst_18 = arith.constant dense<0.000000e+00> : vector<128xf32>
    %27 = vector.multi_reduction <add>, %26, %cst_18 [0] : vector<3x128xf32> to vector<128xf32>
    %28 = vector.shape_cast %27 : vector<128xf32> to vector<1x128xf32>
    %29 = tpu.reciprocal %28 {approx = true} : vector<1x128xf32> -> vector<1x128xf32>
    %30 = vector.broadcast %29 : vector<1x128xf32> to vector<3x128xf32>
    %31 = arith.mulf %26, %30 : vector<3x128xf32>
    %c0_19 = arith.constant 0 : index
    %c0_20 = arith.constant 0 : index
    %32 = vector.load %arg8[%c0_19, %c0_20] : memref<3x128xf32, #tpu.memory_space<vmem>>, vector<3x128xf32>
    tpu.vector_store %arg8[%c0_19, %c0_20], %31 {strides = array<i32>} : memref<3x128xf32, #tpu.memory_space<vmem>>, vector<3x128xf32>,
    return
  }
  func.func @transform_0(%arg0: i32) -> (i32, i32) {
    %c0_i32 = arith.constant 0 : i32
    %c0_i32_0 = arith.constant 0 : i32
    return %c0_i32, %arg0 : i32, i32
  }
  func.func @transform_1(%arg0: i32) -> (i32, i32) {
    %c0_i32 = arith.constant 0 : i32
    %c0_i32_0 = arith.constant 0 : i32
    %c0_i32_1 = arith.constant 0 : i32
    return %c0_i32, %c0_i32_0 : i32, i32
  }
  func.func @transform_2(%arg0: i32) -> (i32, i32) {
    %c0_i32 = arith.constant 0 : i32
    %c0_i32_0 = arith.constant 0 : i32
    %c0_i32_1 = arith.constant 0 : i32
    return %c0_i32, %c0_i32_0 : i32, i32
  }
  func.func @transform_3(%arg0: i32) -> (i32, i32) {
    %c0_i32 = arith.constant 0 : i32
    %c0_i32_0 = arith.constant 0 : i32
    %c0_i32_1 = arith.constant 0 : i32
    return %c0_i32, %c0_i32_0 : i32, i32
  }
  func.func @transform_4(%arg0: i32) -> (i32, i32) {
    %c0_i32 = arith.constant 0 : i32
    %c0_i32_0 = arith.constant 0 : i32
    %c0_i32_1 = arith.constant 0 : i32
    return %c0_i32, %c0_i32_0 : i32, i32
  }
  func.func @transform_5(%arg0: i32) -> (i32, i32) {
    %c0_i32 = arith.constant 0 : i32
    %c0_i32_0 = arith.constant 0 : i32
    %c0_i32_1 = arith.constant 0 : i32
    return %c0_i32, %c0_i32_0 : i32, i32
  }
  func.func @transform_6(%arg0: i32) -> (i32, i32) {
    %c0_i32 = arith.constant 0 : i32
    %c0_i32_0 = arith.constant 0 : i32
    %c0_i32_1 = arith.constant 0 : i32
    return %c0_i32, %c0_i32_0 : i32, i32
  }
  func.func @transform_7(%arg0: i32) -> (i32, i32) {
    %c0_i32 = arith.constant 0 : i32
    %c0_i32_0 = arith.constant 0 : i32
    return %c0_i32, %arg0 : i32, i32
  }
}

</mosaic_0001>

<llo_original>
// kernel: tpu_custom_call.1
$region0: #{tpu_custom_call.1}
  #allocation0 [shape = 'u32[]', space=smem, size = 0x4, offset = 0x4, fixed_abs, tag = 'smem constant byte address 0x4 - core index']
  #allocation1 [shape = 'u32[144,128]{1,0:T(1,128)}', space=vmem, size = 0x12000, scoped, tag = 'internal scratch']
  %s0 = inlined_call_operand.vmem [shape: bf16[4,128], index: 0, kind: input, shape index: {}]
  %s1 = inlined_call_operand.vmem [shape: bf16[64,4], index: 1, kind: input, shape index: {}]
  %s2 = inlined_call_operand.vmem [shape: f32[64,1], index: 2, kind: input, shape index: {}]
  %s3 = inlined_call_operand.vmem [shape: bf16[32,64], index: 3, kind: input, shape index: {}]
  %s4 = inlined_call_operand.vmem [shape: f32[32,1], index: 4, kind: input, shape index: {}]
  %s5 = inlined_call_operand.vmem [shape: bf16[3,32], index: 5, kind: input, shape index: {}]
  %s6 = inlined_call_operand.vmem [shape: f32[3,1], index: 6, kind: input, shape index: {}]
  %s7 = inlined_call_operand.hbm [shape: f32[3,128], index: 7, kind: output, shape index: {}]
  %s8 = sld [smem:[#allocation0]]
  $region38: #{tpu_custom_call.1} parent=0
    _
  %s10 = ssub.s32 1, %s8
  %s11 = scalar_select 0, %s10, %s8
  $region1: #{tpu_custom_call.1} parent=0
    #allocation2 [shape = 'u8[2048]{0}', space=vmem, size = 0x800, scoped, tag = 'output window, operand 0, single buffered']
    #allocation3 [shape = 's32[1]{0}', space=sflag, size = 0x4, scoped, tag = 'scoped memory for tpu_custom_call.1']
    %12 = vsyncpa [#allocation3], 0
    // Predicated region
    $region2: #{tpu_custom_call.1} parent=1 // pred_check
      _
    $region3: #{tpu_custom_call.1} parent=1 // pred_check_branch
      %14 = sbr.rel (0) target = $region5
    $region4: #{tpu_custom_call.1} parent=1 // pred_region
      _
    $region5: #{tpu_custom_call.1} parent=1 // pred_fallthru
      _
    // Predicated region
    $region6: #{tpu_custom_call.1} parent=1 // pred_check
      _
    $region7: #{tpu_custom_call.1} parent=1 // pred_check_branch
      %16 = sbr.rel (0) target = $region9
    $region8: #{tpu_custom_call.1} parent=1 // pred_region
      _
    $region9: #{tpu_custom_call.1} parent=1 // pred_fallthru
      _
    // Predicated region
    $region10: #{tpu_custom_call.1} parent=1 // pred_check
      _
    $region11: #{tpu_custom_call.1} parent=1 // pred_check_branch
      %18 = sbr.rel (0) target = $region13
    $region12: #{tpu_custom_call.1} parent=1 // pred_region
      _
    $region13: #{tpu_custom_call.1} parent=1 // pred_fallthru
      _
    // Predicated region
    $region14: #{tpu_custom_call.1} parent=1 // pred_check
      _
    $region15: #{tpu_custom_call.1} parent=1 // pred_check_branch
      %20 = sbr.rel (0) target = $region17
    $region16: #{tpu_custom_call.1} parent=1 // pred_region
      _
    $region17: #{tpu_custom_call.1} parent=1 // pred_fallthru
      _
    // Predicated region
    $region18: #{tpu_custom_call.1} parent=1 // pred_check
      _
    $region19: #{tpu_custom_call.1} parent=1 // pred_check_branch
      %22 = sbr.rel (0) target = $region21
    $region20: #{tpu_custom_call.1} parent=1 // pred_region
      _
    $region21: #{tpu_custom_call.1} parent=1 // pred_fallthru
      _
    // Predicated region
    $region22: #{tpu_custom_call.1} parent=1 // pred_check
      _
    $region23: #{tpu_custom_call.1} parent=1 // pred_check_branch
      %24 = sbr.rel (0) target = $region25
    $region24: #{tpu_custom_call.1} parent=1 // pred_region
      _
    $region25: #{tpu_custom_call.1} parent=1 // pred_fallthru
      _
    // Predicated region
    $region26: #{tpu_custom_call.1} parent=1 // pred_check
      _
    $region27: #{tpu_custom_call.1} parent=1 // pred_check_branch
      %26 = sbr.rel (0) target = $region29
    $region28: #{tpu_custom_call.1} parent=1 // pred_region
      _
    $region29: #{tpu_custom_call.1} parent=1 // pred_fallthru
      _
    %v28 = vld [vmem:[%s0] sm:$0x3]
    %v29 = vld [vmem:[%s1] sm:$0xf]
    %v30 = vld [vmem:[%s1 + $0x4] sm:$0xf]
    %v31 = vld [vmem:[%s1 + $0x8] sm:$0xf]
    %v32 = vld [vmem:[%s1 + $0xc] sm:$0xf]
    %v33 = vld [vmem:[%s1 + $0x10] sm:$0xf]
    %v34 = vld [vmem:[%s1 + $0x14] sm:$0xf]
    %v35 = vld [vmem:[%s1 + $0x18] sm:$0xf]
    %v36 = vld [vmem:[%s1 + $0x1c] sm:$0xf]
    %v37 = vld [vmem:[%s2] sm:$0xff]
    %v38 = vld [vmem:[%s2 + $0x8] sm:$0xff]
    %v39 = vld [vmem:[%s2 + $0x10] sm:$0xff]
    %v40 = vld [vmem:[%s2 + $0x18] sm:$0xff]
    %v41 = vld [vmem:[%s2 + $0x20] sm:$0xff]
    %v42 = vld [vmem:[%s2 + $0x28] sm:$0xff]
    %v43 = vld [vmem:[%s2 + $0x30] sm:$0xff]
    %v44 = vld [vmem:[%s2 + $0x38] sm:$0xff]
    %46 = vset.pattern.permute.xlu0 0
    %47 = vperm.xlu0 %46, %v37
    %v48 = vpop.permute.xlu0 %47
    %51 = vset.pattern.permute.xlu0 0
    %52 = vperm.xlu0 %51, %v38
    %v53 = vpop.permute.xlu0 %52
    %56 = vset.pattern.permute.xlu0 0
    %57 = vperm.xlu0 %56, %v39
    %v58 = vpop.permute.xlu0 %57
    %61 = vset.pattern.permute.xlu0 0
    %62 = vperm.xlu0 %61, %v40
    %v63 = vpop.permute.xlu0 %62
    %66 = vset.pattern.permute.xlu0 0
    %67 = vperm.xlu0 %66, %v41
    %v68 = vpop.permute.xlu0 %67
    %71 = vset.pattern.permute.xlu0 0
    %72 = vperm.xlu0 %71, %v42
    %v73 = vpop.permute.xlu0 %72
    %76 = vset.pattern.permute.xlu0 0
    %77 = vperm.xlu0 %76, %v43
    %v78 = vpop.permute.xlu0 %77
    %81 = vset.pattern.permute.xlu0 0
    %82 = vperm.xlu0 %81, %v44
    %v83 = vpop.permute.xlu0 %82
    %v93 = vunpack.c.l.b16 %v29
    %v94 = vunpack.c.l.b16 %v30
    %v95 = vunpack.c.l.b16 %v31
    %v96 = vunpack.c.l.b16 %v32
    %v97 = vunpack.c.l.b16 %v33
    %v98 = vunpack.c.l.b16 %v34
    %v99 = vunpack.c.l.b16 %v35
    %v100 = vunpack.c.l.b16 %v36
    %v101 = vpack.c.b16 %v94, %v93
    %v102 = vpack.c.b16 %v96, %v95
    %v103 = vpack.c.b16 %v98, %v97
    %v104 = vpack.c.b16 %v100, %v99
    %vm105 = vcmask 31744
    %v107 = vsel %vm105, %v101, 0
    %v110 = vsel %vm105, %v102, 0
    %v113 = vsel %vm105, %v103, 0
    %v116 = vsel %vm105, %v104, 0
    %vm118 = vcmask 1041408
    %v120 = vsel %vm118, %v28, 0
    %122 = vmatprep.subr.bf16.mxu0 0
    %123 = vmatpush1.bf16.msra.mxu0 0
    %124 = vmatprep.subr.bf16.mxu0 0
    %125 = vmatpush1.bf16.msra.mxu0 0
    %126 = vmatprep.subr.bf16.mxu0 0
    %127 = vmatpush1.bf16.msra.mxu0 0
    %128 = vmatprep.subr.bf16.mxu0 0
    %129 = vmatpush1.bf16.msra.mxu0 0
    %130 = vmatprep.subr.bf16.mxu0 0
    %131 = vmatpush1.bf16.msra.mxu0 0
    %132 = vmatprep.subr.bf16.mxu0 0
    %133 = vmatpush1.bf16.msra.mxu0 0
    %134 = vmatprep.subr.bf16.mxu0 0
    %135 = vmatpush1.bf16.msra.mxu0 0
    %136 = vmatprep.subr.bf16.mxu0 0
    %137 = vmatpush1.bf16.msra.mxu0 %v120
    %138 = vmatprep.subr.bf16.mxu0 0
    %139 = vmatpush2.bf16.msra.mxu0 0
    %140 = vmatprep.subr.bf16.mxu0 0
    %141 = vmatpush2.bf16.msra.mxu0 0
    %142 = vmatprep.subr.bf16.mxu0 0
    %143 = vmatpush2.bf16.msra.mxu0 0
    %144 = vmatprep.subr.bf16.mxu0 0
    %145 = vmatpush2.bf16.msra.mxu0 0
    %146 = vmatprep.subr.bf16.mxu0 0
    %147 = vmatpush2.bf16.msra.mxu0 0
    %148 = vmatprep.subr.bf16.mxu0 0
    %149 = vmatpush2.bf16.msra.mxu0 0
    %150 = vmatprep.subr.bf16.mxu0 0
    %151 = vmatpush2.bf16.msra.mxu0 0
    %152 = vmatprep.subr.bf16.mxu0 0
    %153 = vmatpush2.bf16.msra.mxu0 0
    %154 = vmatprep.mubr.bf16.mxu0 0
    %155 = vmatmul.mubr.bf16.gmra.mxu0 %v107
    %v156 = vpop.f32.mrf.mxu0
    %v157 = vadd.f32 %v48, %v156
    %v158 = vpop.f32.mrf.mxu0
    %v159 = vpop.f32.mrf.mxu0
    %v160 = vadd.f32 %v53, %v159
    %v161 = vpop.f32.mrf.mxu0
    %162 = vmatprep.mubr.bf16.mxu0 0
    %163 = vmatmul.mubr.bf16.gmra.mxu0 %v110
    %v164 = vpop.f32.mrf.mxu0
    %v165 = vadd.f32 %v58, %v164
    %v166 = vpop.f32.mrf.mxu0
    %v167 = vpop.f32.mrf.mxu0
    %v168 = vadd.f32 %v63, %v167
    %v169 = vpop.f32.mrf.mxu0
    %170 = vmatprep.mubr.bf16.mxu0 0
    %171 = vmatmul.mubr.bf16.gmra.mxu0 %v113
    %v172 = vpop.f32.mrf.mxu0
    %v173 = vadd.f32 %v68, %v172
    %v174 = vpop.f32.mrf.mxu0
    %v175 = vpop.f32.mrf.mxu0
    %v176 = vadd.f32 %v73, %v175
    %v177 = vpop.f32.mrf.mxu0
    %178 = vmatprep.mubr.bf16.mxu0 0
    %179 = vmatmul.mubr.bf16.gmra.mxu0 %v116
    %v180 = vpop.f32.mrf.mxu0
    %v181 = vadd.f32 %v78, %v180
    %v182 = vpop.f32.mrf.mxu0
    %v183 = vpop.f32.mrf.mxu0
    %v184 = vadd.f32 %v83, %v183
    %v185 = vpop.f32.mrf.mxu0
    %186 = vdwg.mxu0
    %v187 = vmax.f32 %v157, 0.0
    %v188 = vmax.f32 %v160, 0.0
    %v189 = vmax.f32 %v165, 0.0
    %v190 = vmax.f32 %v168, 0.0
    %v191 = vmax.f32 %v173, 0.0
    %v192 = vmax.f32 %v176, 0.0
    %v193 = vmax.f32 %v181, 0.0
    %v194 = vmax.f32 %v184, 0.0
    %v195 = vld [vmem:[%s3] sm:$0xf]
    %v196 = vld [vmem:[%s3 + $0x4] sm:$0xf]
    %v197 = vld [vmem:[%s3 + $0x8] sm:$0xf]
    %v198 = vld [vmem:[%s3 + $0xc] sm:$0xf]
    %v199 = vpack.c.bf16 %v188, %v187
    %v200 = vpack.c.bf16 %v190, %v189
    %v201 = vpack.c.bf16 %v192, %v191
    %v202 = vpack.c.bf16 %v194, %v193
    %v203 = vld [vmem:[%s4] sm:$0xff]
    %v204 = vld [vmem:[%s4 + $0x8] sm:$0xff]
    %v205 = vld [vmem:[%s4 + $0x10] sm:$0xff]
    %v206 = vld [vmem:[%s4 + $0x18] sm:$0xff]
    %208 = vset.pattern.permute.xlu0 0
    %209 = vperm.xlu0 %208, %v203
    %v210 = vpop.permute.xlu0 %209
    %213 = vset.pattern.permute.xlu0 0
    %214 = vperm.xlu0 %213, %v204
    %v215 = vpop.permute.xlu0 %214
    %218 = vset.pattern.permute.xlu0 0
    %219 = vperm.xlu0 %218, %v205
    %v220 = vpop.permute.xlu0 %219
    %223 = vset.pattern.permute.xlu0 0
    %224 = vperm.xlu0 %223, %v206
    %v225 = vpop.permute.xlu0 %224
    %v231 = vunpack.c.l.b16 %v195
    %v232 = vunpack.c.l.b16 %v196
    %v233 = vunpack.c.l.b16 %v197
    %v234 = vunpack.c.l.b16 %v198
    %v235 = vpack.c.b16 %v232, %v231
    %v236 = vpack.c.b16 %v234, %v233
    %vm237 = vcmask 523264
    %v239 = vsel %vm237, %v235, 0
    %v242 = vsel %vm237, %v236, 0
    %244 = vmatprep.subr.bf16.mxu0 0
    %245 = vmatpush1.bf16.msra.mxu0 0
    %246 = vmatprep.subr.bf16.mxu0 0
    %247 = vmatpush1.bf16.msra.mxu0 0
    %248 = vmatprep.subr.bf16.mxu0 0
    %249 = vmatpush1.bf16.msra.mxu0 0
    %250 = vmatprep.subr.bf16.mxu0 0
    %251 = vmatpush1.bf16.msra.mxu0 0
    %252 = vmatprep.subr.bf16.mxu0 0
    %253 = vmatpush1.bf16.msra.mxu0 %v202
    %254 = vmatprep.subr.bf16.mxu0 0
    %255 = vmatpush1.bf16.msra.mxu0 %v201
    %256 = vmatprep.subr.bf16.mxu0 0
    %257 = vmatpush1.bf16.msra.mxu0 %v200
    %258 = vmatprep.subr.bf16.mxu0 0
    %259 = vmatpush1.bf16.msra.mxu0 %v199
    %260 = vmatprep.subr.bf16.mxu0 0
    %261 = vmatpush2.bf16.msra.mxu0 0
    %262 = vmatprep.subr.bf16.mxu0 0
    %263 = vmatpush2.bf16.msra.mxu0 0
    %264 = vmatprep.subr.bf16.mxu0 0
    %265 = vmatpush2.bf16.msra.mxu0 0
    %266 = vmatprep.subr.bf16.mxu0 0
    %267 = vmatpush2.bf16.msra.mxu0 0
    %268 = vmatprep.subr.bf16.mxu0 0
    %269 = vmatpush2.bf16.msra.mxu0 0
    %270 = vmatprep.subr.bf16.mxu0 0
    %271 = vmatpush2.bf16.msra.mxu0 0
    %272 = vmatprep.subr.bf16.mxu0 0
    %273 = vmatpush2.bf16.msra.mxu0 0
    %274 = vmatprep.subr.bf16.mxu0 0
    %275 = vmatpush2.bf16.msra.mxu0 0
    %276 = vmatprep.mubr.bf16.mxu0 0
    %277 = vmatmul.mubr.bf16.gmra.mxu0 %v239
    %v278 = vpop.f32.mrf.mxu0
    %v279 = vadd.f32 %v210, %v278
    %v280 = vpop.f32.mrf.mxu0
    %v281 = vpop.f32.mrf.mxu0
    %v282 = vadd.f32 %v215, %v281
    %v283 = vpop.f32.mrf.mxu0
    %284 = vmatprep.mubr.bf16.mxu0 0
    %285 = vmatmul.mubr.bf16.gmra.mxu0 %v242
    %v286 = vpop.f32.mrf.mxu0
    %v287 = vadd.f32 %v220, %v286
    %v288 = vpop.f32.mrf.mxu0
    %v289 = vpop.f32.mrf.mxu0
    %v290 = vadd.f32 %v225, %v289
    %v291 = vpop.f32.mrf.mxu0
    %292 = vdwg.mxu0
    %v293 = vmax.f32 %v279, 0.0
    %v294 = vmax.f32 %v282, 0.0
    %v295 = vmax.f32 %v287, 0.0
    %v296 = vmax.f32 %v290, 0.0
    %v297 = vld [vmem:[%s5] sm:$0x3]
    %v298 = vpack.c.bf16 %v294, %v293
    %v299 = vpack.c.bf16 %v296, %v295
    %v300 = vld [vmem:[%s6] sm:$0x7]
    %302 = vset.pattern.permute.xlu0 0
    %303 = vperm.xlu0 %302, %v300
    %v304 = vpop.permute.xlu0 %303
    %vm306 = vcmask 261120
    %v308 = vsel %vm306, %v297, 0
    %310 = vmatprep.subr.bf16.mxu0 0
    %311 = vmatpush1.bf16.msra.mxu0 0
    %312 = vmatprep.subr.bf16.mxu0 0
    %313 = vmatpush1.bf16.msra.mxu0 0
    %314 = vmatprep.subr.bf16.mxu0 0
    %315 = vmatpush1.bf16.msra.mxu0 0
    %316 = vmatprep.subr.bf16.mxu0 0
    %317 = vmatpush1.bf16.msra.mxu0 0
    %318 = vmatprep.subr.bf16.mxu0 0
    %319 = vmatpush1.bf16.msra.mxu0 0
    %320 = vmatprep.subr.bf16.mxu0 0
    %321 = vmatpush1.bf16.msra.mxu0 0
    %322 = vmatprep.subr.bf16.mxu0 0
    %323 = vmatpush1.bf16.msra.mxu0 %v299
    %324 = vmatprep.subr.bf16.mxu0 0
    %325 = vmatpush1.bf16.msra.mxu0 %v298
    %326 = vmatprep.subr.bf16.mxu0 0
    %327 = vmatpush2.bf16.msra.mxu0 0
    %328 = vmatprep.subr.bf16.mxu0 0
    %329 = vmatpush2.bf16.msra.mxu0 0
    %330 = vmatprep.subr.bf16.mxu0 0
    %331 = vmatpush2.bf16.msra.mxu0 0
    %332 = vmatprep.subr.bf16.mxu0 0
    %333 = vmatpush2.bf16.msra.mxu0 0
    %334 = vmatprep.subr.bf16.mxu0 0
    %335 = vmatpush2.bf16.msra.mxu0 0
    %336 = vmatprep.subr.bf16.mxu0 0
    %337 = vmatpush2.bf16.msra.mxu0 0
    %338 = vmatprep.subr.bf16.mxu0 0
    %339 = vmatpush2.bf16.msra.mxu0 0
    %340 = vmatprep.subr.bf16.mxu0 0
    %341 = vmatpush2.bf16.msra.mxu0 0
    %342 = vmatprep.mubr.bf16.mxu0 0
    %343 = vmatmul.mubr.bf16.gmra.mxu0 %v308
    %v344 = vpop.f32.mrf.mxu0
    %v345 = vadd.f32 %v304, %v344
    %v346 = vpop.f32.mrf.mxu0
    %v347 = vpop.f32.mrf.mxu0
    %v348 = vpop.f32.mrf.mxu0
    %349 = vdwg.mxu0
    %vm350 = vcmask 1042432
    %v351 = vsel %vm350, %v345, -inf
    %v352 = vrot.slane %v351, 4
    %v353 = vmax.f32 %v351, %v352
    %v354 = vrot.slane %v353, 2
    %v355 = vmax.f32 %v353, %v354
    %v356 = vrot.slane %v355, 1
    %v357 = vmax.f32 %v355, %v356
    %v358 = vsub.f32 %v345, %v357
    %v359 = vmul.f32 %v358, 1.442695
    %v360 = vpow.pop %v359
    %v361 = vsel %vm350, %v360, 0.0
    %v362 = vrot.slane %v361, 4
    %v363 = vadd.f32 %v361, %v362
    %v364 = vrot.slane %v363, 2
    %v365 = vadd.f32 %v363, %v364
    %v366 = vrot.slane %v365, 1
    %v367 = vadd.f32 %v365, %v366
    %v368 = vrcp.pop %v367
    %v369 = vmul.f32 %v360, %v368
    %370 = vst [vmem:[#allocation2] sm:$0x7] %v369
    // Predicated region
    $region30: #{tpu_custom_call.1} parent=1 // pred_check
      _
    $region31: #{tpu_custom_call.1} parent=1 // pred_check_branch
      %372 = sbr.rel (0) target = $region33
    $region32: #{tpu_custom_call.1} parent=1 // pred_region
      %s374 = ssub.s32 64, 64
      %375 = vsyncadd [#allocation3], %s374
      %s377 = sshll.u32 [#allocation2], 4
      %s378 = int_to_ptr.vmem [resolvable:$true] %s377
      %380 = dma.vmem_to_hbm [thread:$0]  %s378, 64, %s7, [#allocation3]
    $region33: #{tpu_custom_call.1} parent=1 // pred_fallthru
      _
    // Predicated region
    $region34: #{tpu_custom_call.1} parent=1 // pred_check
      _
    $region35: #{tpu_custom_call.1} parent=1 // pred_check_branch
      %382 = sbr.rel (0) target = $region37
    $region36: #{tpu_custom_call.1} parent=1 // pred_region
      %383 = dma.done [#allocation3], 64
    $region37: #{tpu_custom_call.1} parent=1 // pred_fallthru
      _
    %384 = vsyncpa [#allocation3], 1

</llo_original>
